<compile_context>
chip_gen: v6e
topology: v6e:2x2x1
jax: 0.10.0
libtpu: 0.0.40
codegen_flags: <defaults>
</compile_context>

<pallas_src>
import functools

import jax
import jax.numpy as jnp
from jax.experimental import pallas as pl
from jax.experimental.pallas import tpu as pltpu


def _focal_kernel(logits_ref, tgt_ref, out_ref, *,
                  alpha, gamma, inv_n, n_rows, block_n, reduction):
    pid = pl.program_id(0)

    logits = logits_ref[...].astype(jnp.float32)           # (block_n, C) f32
    tgt = tgt_ref[...]                                      # (block_n, 1) int32

    # Numerically-stable log-sum-exp over the class (lane) axis.
    row_max = jnp.max(logits, axis=-1, keepdims=True)       # (block_n, 1)
    lse = jnp.log(jnp.sum(jnp.exp(logits - row_max), axis=-1, keepdims=True)) + row_max

    # Gather the target logit via a one-hot compare against a lane iota
    # (no per-row dynamic gather needed on the VPU).
    col = jax.lax.broadcasted_iota(jnp.int32, logits.shape, 1)
    tgt_logit = jnp.sum(jnp.where(col == tgt, logits, 0.0), axis=-1, keepdims=True)

    ce = lse - tgt_logit                                     # (block_n, 1) per-row CE

    # Row validity: ignore_index == -100, plus padded rows of the tail block.
    row = pid * block_n + jax.lax.broadcasted_iota(jnp.int32, (block_n, 1), 0)
    valid = (tgt != -100) & (row < n_rows)
    # Clamp to >= 0 so pt = exp(-ce) <= 1 and (1 - pt) >= 0 (avoids pow NaNs).
    ce = jnp.where(valid, jnp.maximum(ce, 0.0), 0.0)

    pt = jnp.exp(-ce)
    omp = 1.0 - pt
    g = float(gamma)
    if g == 0.0:
        focal = jnp.ones_like(omp)
    elif g == int(g) and 0 < int(g) <= 8:
        # Integer gamma (default 2.0): explicit multiply chain on the VPU.
        focal = omp
        for _ in range(int(g) - 1):
            focal = focal * omp
    else:
        focal = jnp.power(jnp.maximum(omp, 0.0), g)

    loss = (alpha * focal) * ce                              # (block_n, 1) f32

    if reduction in ("mean", "sum"):
        # Resident (1,1) output accumulator across the 'arbitrary' grid axis.
        @pl.when(pid == 0)
        def _init():
            out_ref[...] = jnp.zeros_like(out_ref)

        out_ref[...] = out_ref[...] + jnp.sum(loss)

        if reduction == "mean":
            @pl.when(pid == pl.num_programs(0) - 1)
            def _finalize():
                out_ref[...] = out_ref[...] * inv_n          # precomputed 1/N, no divide
    else:
        out_ref[...] = loss


def _choose_block_n(n, c, itemsize):
    """Largest row tile that comfortably double-buffers on v5e/v6e/v7x."""
    align = 16 if itemsize < 4 else 8          # bf16/fp16 sublane packing is 16
    budget = 16 * 2 ** 20                      # conservative per-step VMEM budget
    per_row = c * (2 * itemsize + 5 * 4) + 2 * 128 * 4   # dbl-buffered block + f32 temps + tgt col
    bn = budget // max(per_row, 1)
    bn = max(align, (bn // align) * align)
    bn = min(bn, 1024)
    n_pad = ((n + align - 1) // align) * align
    return min(bn, n_pad)


def focal_loss(outputs, targets, *, alpha=1.0, gamma=2.0, reduction="mean",
               block_n=None):
    """Pallas TPU implementation of FocalLoss.forward.

    outputs: (N, C) float logits (fed in native dtype; cast to f32 in-kernel)
    targets: (N,)   int class indices (may contain -100 = ignore_index)
    """
    n, c = outputs.shape
    itemsize = jnp.dtype(outputs.dtype).itemsize
    align = 16 if itemsize < 4 else 8
    n_pad = ((n + align - 1) // align) * align

    if block_n is None:
        block_n = _choose_block_n(n, c, itemsize)
    else:
        block_n = max(align, ((int(block_n) + align - 1) // align) * align)
        block_n = min(block_n, n_pad)
    num_blocks = (n + block_n - 1) // block_n

    tgt2d = targets.reshape(n, 1).astype(jnp.int32)

    kernel = functools.partial(
        _focal_kernel,
        alpha=float(alpha),
        gamma=float(gamma),
        inv_n=1.0 / float(n),       # torch .mean() divides by ALL rows, incl. ignored
        n_rows=n,
        block_n=block_n,
        reduction=reduction,
    )

    in_specs = [
        pl.BlockSpec((block_n, c), lambda i: (i, 0)),   # logits tile (pipelined)
        pl.BlockSpec((block_n, 1), lambda i: (i, 0)),   # target column tile
    ]

    if reduction in ("mean", "sum"):
        out_shape = jax.ShapeDtypeStruct((1, 1), jnp.float32)
        out_specs = pl.BlockSpec((1, 1), lambda i: (0, 0))   # resident accumulator
        dim_sem = ("arbitrary",)
    else:
        out_shape = jax.ShapeDtypeStruct((n, 1), jnp.float32)
        out_specs = pl.BlockSpec((block_n, 1), lambda i: (i, 0))
        dim_sem = ("parallel",)

    # Explicit VMEM limit with headroom (stays within every generation's budget).
    vmem_est = (2 * block_n * c * itemsize        # double-buffered logits blocks
                + 2 * block_n * 128 * 4           # target column blocks (lane-padded)
                + 6 * block_n * c * 4             # f32 temporaries in the body
                + 4 * block_n * 128 * 4)          # loss / output columns + slack
    vmem_limit = int(min(64 * 2 ** 20, max(32 * 2 ** 20, 2 * vmem_est)))

    result = pl.pallas_call(
        kernel,
        out_shape=out_shape,
        grid=(num_blocks,),
        in_specs=in_specs,
        out_specs=out_specs,
        compiler_params=pltpu.CompilerParams(
            dimension_semantics=dim_sem,
            vmem_limit_bytes=vmem_limit,
        ),
    )(outputs, tgt2d)

    if reduction in ("mean", "sum"):
        return result[0, 0]
    return result[:, 0]


def _focal_loss_ref(outputs, targets, alpha=1.0, gamma=2.0, reduction="mean"):
    # Pure-JAX reference for sanity checks.
    logits = outputs.astype(jnp.float32)
    logp = jax.nn.log_softmax(logits, axis=-1)
    safe_t = jnp.where(targets == -100, 0, targets)
    ce = -jnp.take_along_axis(logp, safe_t[:, None], axis=-1)[:, 0]
    ce = jnp.where(targets == -100, 0.0, ce)
    pt = jnp.exp(-ce)
    loss = alpha * (1.0 - pt) ** gamma * ce
    if reduction == "mean":
        return loss.mean()
    if reduction == "sum":
        return loss.sum()
    return loss


if __name__ == "__main__":
    key = jax.random.PRNGKey(0)
    k1, k2 = jax.random.split(key)

    N, C = 50, 32                       # small (batch, num_classes); N not a tile multiple
    outputs = jax.random.normal(k1, (N, C), dtype=jnp.float32)
    targets = jax.random.randint(k2, (N,), 0, C, dtype=jnp.int32)
    targets = targets.at[3].set(-100).at[17].set(-100)   # exercise ignore_index=-100

    # Small explicit tile -> multiple pipelined grid steps + padded tail block.
    loss_mean = focal_loss(outputs, targets, alpha=1.0, gamma=2.0,
                           reduction="mean", block_n=16)
    loss_sum = focal_loss(outputs, targets, alpha=0.25, gamma=2.0,
                          reduction="sum", block_n=16)
    loss_none = focal_loss(outputs, targets, alpha=1.0, gamma=2.0,
                           reduction="none", block_n=16)
    # Auto-chosen tile (single block) and native-bf16 input path.
    loss_auto = focal_loss(outputs, targets, alpha=1.0, gamma=2.0, reduction="mean")
    outputs_bf16 = outputs.astype(jnp.bfloat16)
    loss_bf16 = focal_loss(outputs_bf16, targets, alpha=1.0, gamma=2.0, reduction="mean")

    jax.block_until_ready((loss_mean, loss_sum, loss_none, loss_auto, loss_bf16))

    ref_mean = _focal_loss_ref(outputs, targets, 1.0, 2.0, "mean")
    ref_sum = _focal_loss_ref(outputs, targets, 0.25, 2.0, "sum")
    ref_none = _focal_loss_ref(outputs, targets, 1.0, 2.0, "none")
    ref_bf16 = _focal_loss_ref(outputs_bf16, targets, 1.0, 2.0, "mean")

    assert jnp.allclose(loss_mean, ref_mean, rtol=1e-5, atol=1e-6), (loss_mean, ref_mean)
    assert jnp.allclose(loss_auto, ref_mean, rtol=1e-5, atol=1e-6), (loss_auto, ref_mean)
    assert jnp.allclose(loss_sum, ref_sum, rtol=1e-5, atol=1e-5), (loss_sum, ref_sum)
    assert jnp.allclose(loss_none, ref_none, rtol=1e-5, atol=1e-6), (loss_none, ref_none)
    assert jnp.allclose(loss_bf16, ref_bf16, rtol=1e-4, atol=1e-5), (loss_bf16, ref_bf16)

    print("KERNEL_OK")
</pallas_src>

<mosaic_0001>
module attributes {stable_mosaic.version = 11 : i64} {
  func.func @_focal_kernel(%arg0: i32, %arg1: memref<16x32xf32, #tpu.memory_space<vmem>>, %arg2: memref<16x1xi32, #tpu.memory_space<vmem>>, %arg3: memref<1x1xf32, #tpu.memory_space<vmem>>) attributes {dimension_semantics = [#tpu.dimension_semantics<arbitrary>], iteration_bounds = array<i64: 4>, scalar_prefetch = 0 : i64, scratch_operands = 0 : i64, tpu.core_type = #tpu.core_type<tc>, window_params = [{transform_indices = @transform_0, window_bounds = array<i64: 16, 32>}, {transform_indices = @transform_1, window_bounds = array<i64: 16, 1>}, {pipeline_mode = #tpu.pipeline_mode<synchronous>, transform_indices = @transform_2, window_bounds = array<i64: 1, 1>}]} {
    %c0 = arith.constant 0 : index
    %c0_0 = arith.constant 0 : index
    %0 = vector.load %arg1[%c0, %c0_0] : memref<16x32xf32, #tpu.memory_space<vmem>>, vector<16x32xf32>
    %c0_1 = arith.constant 0 : index
    %c0_2 = arith.constant 0 : index
    %1 = vector.load %arg2[%c0_1, %c0_2] : memref<16x1xi32, #tpu.memory_space<vmem>>, vector<16x1xi32>
    %cst = arith.constant dense<0xFF800000> : vector<16xf32>
    %2 = vector.multi_reduction <maximumf>, %0, %cst [1] : vector<16x32xf32> to vector<16xf32>
    %3 = vector.shape_cast %2 : vector<16xf32> to vector<16x1xf32>
    %4 = vector.broadcast %3 : vector<16x1xf32> to vector<16x32xf32>
    %5 = arith.subf %0, %4 : vector<16x32xf32>
    %6 = math.exp %5 : vector<16x32xf32>
    %cst_3 = arith.constant dense<0.000000e+00> : vector<16xf32>
    %7 = vector.multi_reduction <add>, %6, %cst_3 [1] : vector<16x32xf32> to vector<16xf32>
    %8 = vector.shape_cast %7 : vector<16xf32> to vector<16x1xf32>
    %9 = math.log %8 : vector<16x1xf32>
    %10 = arith.addf %9, %3 : vector<16x1xf32>
    %11 = tpu.iota {dimensions = array<i32: 1>} : vector<16x32xi32>
    %12 = vector.broadcast %1 : vector<16x1xi32> to vector<16x32xi32>
    %13 = arith.cmpi eq, %11, %12 : vector<16x32xi32>
    %cst_4 = arith.constant 0.000000e+00 : f32
    %14 = vector.broadcast %cst_4 : f32 to vector<16x32xf32>
    %15 = arith.select %13, %0, %14 : vector<16x32xi1>, vector<16x32xf32>
    %cst_5 = arith.constant dense<0.000000e+00> : vector<16xf32>
    %16 = vector.multi_reduction <add>, %15, %cst_5 [1] : vector<16x32xf32> to vector<16xf32>
    %17 = vector.shape_cast %16 : vector<16xf32> to vector<16x1xf32>
    %18 = arith.subf %10, %17 : vector<16x1xf32>
    %c16_i32 = arith.constant 16 : i32
    %19 = arith.muli %arg0, %c16_i32 : i32
    %20 = tpu.iota {dimensions = array<i32: 0>} : vector<16x1xi32>
    %21 = vector.broadcast %19 : i32 to vector<16x1xi32>
    %22 = arith.addi %21, %20 : vector<16x1xi32>
    %c-100_i32 = arith.constant -100 : i32
    %23 = vector.broadcast %c-100_i32 : i32 to vector<16x1xi32>
    %24 = arith.cmpi ne, %1, %23 : vector<16x1xi32>
    %c50_i32 = arith.constant 50 : i32
    %25 = vector.broadcast %c50_i32 : i32 to vector<16x1xi32>
    %26 = arith.cmpi slt, %22, %25 : vector<16x1xi32>
    %27 = arith.andi %24, %26 : vector<16x1xi1>
    %cst_6 = arith.constant 0.000000e+00 : f32
    %28 = vector.broadcast %cst_6 : f32 to vector<16x1xf32>
    %29 = arith.maximumf %18, %28 : vector<16x1xf32>
    %cst_7 = arith.constant 0.000000e+00 : f32
    %30 = vector.broadcast %cst_7 : f32 to vector<16x1xf32>
    %31 = arith.select %27, %29, %30 : vector<16x1xi1>, vector<16x1xf32>
    %cst_8 = arith.constant 0.000000e+00 : f32
    %32 = vector.broadcast %cst_8 : f32 to vector<16x1xf32>
    %33 = arith.subf %32, %31 : vector<16x1xf32>
    %34 = math.exp %33 : vector<16x1xf32>
    %cst_9 = arith.constant 1.000000e+00 : f32
    %35 = vector.broadcast %cst_9 : f32 to vector<16x1xf32>
    %36 = arith.subf %35, %34 : vector<16x1xf32>
    %37 = arith.mulf %36, %36 : vector<16x1xf32>
    %cst_10 = arith.constant 1.000000e+00 : f32
    %38 = vector.broadcast %cst_10 : f32 to vector<16x1xf32>
    %39 = arith.mulf %38, %37 : vector<16x1xf32>
    %40 = arith.mulf %39, %31 : vector<16x1xf32>
    %c0_i32 = arith.constant 0 : i32
    %41 = arith.cmpi eq, %arg0, %c0_i32 : i32
    %42 = arith.extui %41 : i1 to i32
    %c0_i32_11 = arith.constant 0 : i32
    %43 = arith.cmpi ne, %42, %c0_i32_11 : i32
    scf.if %43 {
      %cst_18 = arith.constant 0.000000e+00 : f32
      %55 = vector.broadcast %cst_18 : f32 to vector<1x1xf32>
      %c0_19 = arith.constant 0 : index
      %c0_20 = arith.constant 0 : index
      %56 = vector.load %arg3[%c0_19, %c0_20] : memref<1x1xf32, #tpu.memory_space<vmem>>, vector<1x1xf32>
      tpu.vector_store %arg3[%c0_19, %c0_20], %55 {strides = array<i32>} : memref<1x1xf32, #tpu.memory_space<vmem>>, vector<1x1xf32>,
    } else {
    }
    %c0_12 = arith.constant 0 : index
    %c0_13 = arith.constant 0 : index
    %44 = vector.load %arg3[%c0_12, %c0_13] : memref<1x1xf32, #tpu.memory_space<vmem>>, vector<1x1xf32>
    %45 = vector.shape_cast %40 : vector<16x1xf32> to vector<1x16x1xf32>
    %cst_14 = arith.constant dense<0.000000e+00> : vector<1xf32>
    %46 = vector.multi_reduction <add>, %45, %cst_14 [1, 2] : vector<1x16x1xf32> to vector<1xf32>
    %47 = vector.shape_cast %46 : vector<1xf32> to vector<1x1x1xf32>
    %48 = vector.extract %47[0, 0, 0] : f32 from vector<1x1x1xf32>
    %49 = vector.broadcast %48 : f32 to vector<1x1xf32>
    %50 = arith.addf %44, %49 : vector<1x1xf32>
    %c0_15 = arith.constant 0 : index
    %c0_16 = arith.constant 0 : index
    %51 = vector.load %arg3[%c0_15, %c0_16] : memref<1x1xf32, #tpu.memory_space<vmem>>, vector<1x1xf32>
    tpu.vector_store %arg3[%c0_15, %c0_16], %50 {strides = array<i32>} : memref<1x1xf32, #tpu.memory_space<vmem>>, vector<1x1xf32>,
    %c3_i32 = arith.constant 3 : i32
    %52 = arith.cmpi eq, %arg0, %c3_i32 : i32
    %53 = arith.extui %52 : i1 to i32
    %c0_i32_17 = arith.constant 0 : i32
    %54 = arith.cmpi ne, %53, %c0_i32_17 : i32
    scf.if %54 {
      %c0_18 = arith.constant 0 : index
      %c0_19 = arith.constant 0 : index
      %55 = vector.load %arg3[%c0_18, %c0_19] : memref<1x1xf32, #tpu.memory_space<vmem>>, vector<1x1xf32>
      %cst_20 = arith.constant 2.000000e-02 : f32
      %56 = vector.broadcast %cst_20 : f32 to vector<1x1xf32>
      %57 = arith.mulf %55, %56 : vector<1x1xf32>
      %c0_21 = arith.constant 0 : index
      %c0_22 = arith.constant 0 : index
      %58 = vector.load %arg3[%c0_21, %c0_22] : memref<1x1xf32, #tpu.memory_space<vmem>>, vector<1x1xf32>
      tpu.vector_store %arg3[%c0_21, %c0_22], %57 {strides = array<i32>} : memref<1x1xf32, #tpu.memory_space<vmem>>, vector<1x1xf32>,
    } else {
    }
    return
  }
  func.func @transform_0(%arg0: i32) -> (i32, i32) {
    %c0_i32 = arith.constant 0 : i32
    %c0_i32_0 = arith.constant 0 : i32
    return %arg0, %c0_i32 : i32, i32
  }
  func.func @transform_1(%arg0: i32) -> (i32, i32) {
    %c0_i32 = arith.constant 0 : i32
    %c0_i32_0 = arith.constant 0 : i32
    return %arg0, %c0_i32 : i32, i32
  }
  func.func @transform_2(%arg0: i32) -> (i32, i32) {
    %c0_i32 = arith.constant 0 : i32
    %c0_i32_0 = arith.constant 0 : i32
    %c0_i32_1 = arith.constant 0 : i32
    return %c0_i32, %c0_i32_0 : i32, i32
  }
}

</mosaic_0001>

<llo_original>
// kernel: tpu_custom_call.1
$region0: #{tpu_custom_call.1}
  #allocation0 [shape = 'u32[]', space=smem, size = 0x4, offset = 0x4, fixed_abs, tag = 'smem constant byte address 0x4 - core index']
  #allocation1 [shape = 'u32[144,128]{1,0:T(1,128)}', space=vmem, size = 0x12000, scoped, tag = 'internal scratch']
  %s0 = inlined_call_operand.vmem [shape: f32[50,32], index: 0, kind: input, shape index: {}]
  %s1 = inlined_call_operand.vmem [shape: s32[50,1], index: 1, kind: input, shape index: {}]
  %s2 = inlined_call_operand.hbm [shape: f32[1,1], index: 2, kind: output, shape index: {}]
  %s3 = sld [smem:[#allocation0]]
  $region49: #{tpu_custom_call.1} parent=0
    _
  %s5 = ssub.s32 1, %s3
  %s6 = scalar_select 0, %s5, %s3
  $region1: #{tpu_custom_call.1} parent=0
    #allocation2 [shape = 'u8[512]{0}', space=vmem, size = 0x400, scoped, tag = 'output window, operand 0, single buffered']
    #allocation3 [shape = 's32[2]{0}', space=sflag, size = 0x8, scoped, tag = 'scoped memory for tpu_custom_call.1']
    %7 = vsyncpa [#allocation3], 0
    loop: start=0, step=1, limit=6
    $region2: #{tpu_custom_call.1} parent=1 // loop_pre_header
      _
    $region3: #{tpu_custom_call.1} parent=1 // loop_header
      %s9 = sphi 0, %s13
      %p10 = scmp.ge.s32.totalorder %s9, 6
      %s19 = sphi 0, %s21
      %s22 = sphi 0, %s19
      %s23 = sphi 0, %s22
      %s39 = sphi 0, %s23
      %s45 = sphi 0, %s47
      %s48 = sphi 0, %s45
      %s49 = sphi 0, %s48
      %s65 = sphi 0, %s49
      %s69 = sphi 0, %s69
      %s71 = sphi 0, %s69
      %s72 = sphi 0, %s71
      %s86 = sphi 0, %s72
    $region4: #{tpu_custom_call.1} parent=1 // loop_header_branch
      %12 = sbr.rel (%p10) target = $region8
    $region5: #{tpu_custom_call.1} parent=1 // loop_body
      %s14 = ssub.s32 %s9, 1
      %s15 = ssub.s32 %s9, 2
      %s16 = sadd.s32 %s9, 1
      %s17 = ssub.s32 %s9, %s16
      %p18 = scmp.eq.s32.totalorder %s17, 0
      %s20 = sadd.s32 %s19, 1
      %s21 = scalar_select %p18, %s19, %s20
      %p24 = pneg %p18
      %p25 = scmp.eq.s32.totalorder %s9, 3
      %p26 = por %p24, %p25
      %p27 = scmp.ne.s32.totalorder %s19, %s22
      %p28 = scmp.eq.s32.totalorder %s9, 0
      %p29 = por %p27, %p28
      %p30 = scmp.ne.s32.totalorder %s19, %s22
      %p31 = scmp.eq.s32.totalorder %s14, 3
      %p32 = por %p30, %p31
      %p33 = scmp.ne.s32.totalorder %s22, %s23
      %p34 = scmp.eq.s32.totalorder %s14, 0
      %p35 = por %p33, %p34
      %p36 = scmp.ne.s32.totalorder %s22, %s23
      %p37 = scmp.eq.s32.totalorder %s15, 3
      %p38 = por %p36, %p37
      %p40 = scmp.ne.s32.totalorder %s23, %s39
      %p41 = scmp.eq.s32.totalorder %s15, 0
      %p42 = por %p40, %p41
      %s43 = ssub.s32 %s9, %s16
      %p44 = scmp.eq.s32.totalorder %s43, 0
      %s46 = sadd.s32 %s45, 1
      %s47 = scalar_select %p44, %s45, %s46
      %p50 = pneg %p44
      %p51 = scmp.eq.s32.totalorder %s9, 3
      %p52 = por %p50, %p51
      %p53 = scmp.ne.s32.totalorder %s45, %s48
      %p54 = scmp.eq.s32.totalorder %s9, 0
      %p55 = por %p53, %p54
      %p56 = scmp.ne.s32.totalorder %s45, %s48
      %p57 = scmp.eq.s32.totalorder %s14, 3
      %p58 = por %p56, %p57
      %p59 = scmp.ne.s32.totalorder %s48, %s49
      %p60 = scmp.eq.s32.totalorder %s14, 0
      %p61 = por %p59, %p60
      %p62 = scmp.ne.s32.totalorder %s48, %s49
      %p63 = scmp.eq.s32.totalorder %s15, 3
      %p64 = por %p62, %p63
      %p66 = scmp.ne.s32.totalorder %s49, %s65
      %p67 = scmp.eq.s32.totalorder %s15, 0
      %p68 = por %p66, %p67
      %s70 = sadd.s32 %s69, 1
      %p73 = scmp.eq.s32.totalorder %s9, 3
      %p74 = scmp.ne.s32.totalorder %s69, %s71
      %p75 = scmp.eq.s32.totalorder %s9, 0
      %p76 = por %p74, %p75
      %p77 = scmp.ne.s32.totalorder %s69, %s71
      %p78 = scmp.eq.s32.totalorder %s14, 3
      %p79 = por %p77, %p78
      %p80 = scmp.ne.s32.totalorder %s71, %s72
      %p81 = scmp.eq.s32.totalorder %s14, 0
      %p82 = por %p80, %p81
      %p83 = scmp.ne.s32.totalorder %s71, %s72
      %p84 = scmp.eq.s32.totalorder %s15, 3
      %p85 = por %p83, %p84
      %p87 = scmp.ne.s32.totalorder %s72, %s86
      %p88 = scmp.eq.s32.totalorder %s15, 0
      %p89 = por %p87, %p88
      %p90 = scmp.le.s32.totalorder 1, %s9
      %p91 = scmp.lt.s32.totalorder %s9, 5
      %p92 = pnand %p90, %p91
      %p93 = pneg %p92
      // Predicated region
      $region9: #{tpu_custom_call.1} parent=5 // pred_check
        _
      $region10: #{tpu_custom_call.1} parent=5 // pred_check_branch
        %95 = sbr.rel (%p92) target = $region12
      $region11: #{tpu_custom_call.1} parent=5 // pred_region
        %s96 = ssub.s32 %s9, 1
      $region12: #{tpu_custom_call.1} parent=5 // pred_fallthru
        _
      %p97 = scmp.lt.s32.totalorder %s9, 4
      // Predicated region
      $region13: #{tpu_custom_call.1} parent=5 // pred_check
        %p98 = pneg %p97
      $region14: #{tpu_custom_call.1} parent=5 // pred_check_branch
        %100 = sbr.rel (%p98) target = $region16
      $region15: #{tpu_custom_call.1} parent=5 // pred_region
        // Predicated region
        $region17: #{tpu_custom_call.1} parent=15 // pred_check
          %p101 = pneg %p29
        $region18: #{tpu_custom_call.1} parent=15 // pred_check_branch
          %103 = sbr.rel (%p101) target = $region20
        $region19: #{tpu_custom_call.1} parent=15 // pred_region
          %s104 = smul.u32 2, %s9
          %s105 = ssub.s32 7, %s104
          %p106 = scmp.lt.s32.totalorder %s105, 2
          %s107 = scalar_select %p106, %s105, 2
          %s108 = smul.u32 128, %s107
          %p109 = scmp.lt.s32.totalorder %s104, 6
          %s110 = scalar_select %p109, %s104, 6
          %s111 = smul.addr %s110, 8
          %s112 = scalar_lea.vmem %s0, %s111
          %s113 = smul.u32 2, %s9
          %s114 = ssub.s32 7, %s113
          %p115 = scmp.lt.s32.totalorder %s114, 2
          %s116 = scalar_select %p115, %s114, 2
          %s117 = smul.u32 128, %s116
        $region20: #{tpu_custom_call.1} parent=15 // pred_fallthru
          _
        // Predicated region
        $region21: #{tpu_custom_call.1} parent=15 // pred_check
          %p118 = pneg %p55
        $region22: #{tpu_custom_call.1} parent=15 // pred_check_branch
          %120 = sbr.rel (%p118) target = $region24
        $region23: #{tpu_custom_call.1} parent=15 // pred_region
          %s121 = smul.u32 2, %s9
          %s122 = ssub.s32 7, %s121
          %p123 = scmp.lt.s32.totalorder %s122, 2
          %s124 = scalar_select %p123, %s122, 2
          %s125 = smul.u32 128, %s124
          %p126 = scmp.lt.s32.totalorder %s121, 6
          %s127 = scalar_select %p126, %s121, 6
          %s128 = smul.addr %s127, 8
          %s129 = scalar_lea.vmem %s1, %s128
          %s130 = smul.u32 2, %s9
          %s131 = ssub.s32 7, %s130
          %p132 = scmp.lt.s32.totalorder %s131, 2
          %s133 = scalar_select %p132, %s131, 2
          %s134 = smul.u32 128, %s133
        $region24: #{tpu_custom_call.1} parent=15 // pred_fallthru
          _
      $region16: #{tpu_custom_call.1} parent=5 // pred_fallthru
        _
      %p135 = scmp.le.s32.totalorder 1, %s9
      %p136 = scmp.lt.s32.totalorder %s9, 5
      %p137 = pnand %p135, %p136
      %p138 = pneg %p137
      // Predicated region
      $region25: #{tpu_custom_call.1} parent=5 // pred_check
        _
      $region26: #{tpu_custom_call.1} parent=5 // pred_check_branch
        %140 = sbr.rel (%p137) target = $region28
      $region27: #{tpu_custom_call.1} parent=5 // pred_region
        %s141 = ssub.s32 %s9, 1
        %s142 = smul.u32 2, %s14
        %s143 = ssub.s32 7, %s142
        %p144 = scmp.lt.s32.totalorder %s143, 2
        %s145 = scalar_select %p144, %s143, 2
        %s146 = smul.u32 128, %s145
        %p147 = scmp.lt.s32.totalorder %s142, 6
        %s148 = scalar_select %p147, %s142, 6
        %s149 = smul.addr %s148, 8
        %s150 = scalar_lea.vmem %s0, %s149
        %p151 = pneg %p35
        %p152 = pneg %p32
        %s153 = smul.u32 2, %s14
        %s154 = ssub.s32 7, %s153
        %p155 = scmp.lt.s32.totalorder %s154, 2
        %s156 = scalar_select %p155, %s154, 2
        %s157 = smul.u32 128, %s156
        %p158 = scmp.lt.s32.totalorder %s153, 6
        %s159 = scalar_select %p158, %s153, 6
        %s160 = smul.addr %s159, 8
        %s161 = scalar_lea.vmem %s1, %s160
        %p162 = pneg %p61
        %p163 = pneg %p58
        %p164 = pneg %p82
        %p165 = pneg %p79
        %s166 = smul.u32 2, %s14
        %s167 = ssub.s32 7, %s166
        %p168 = scmp.lt.s32.totalorder %s167, 2
        %s169 = scalar_select %p168, %s167, 2
        %s170 = smul.u32 128, %s169
        %p171 = scmp.lt.s32.totalorder %s166, 6
        %s172 = scalar_select %p171, %s166, 6
        %s173 = smul.addr %s172, 8
        %s174 = scalar_lea.vmem %s0, %s173
        %s175 = smul.u32 2, %s14
        %s176 = ssub.s32 7, %s175
        %p177 = scmp.lt.s32.totalorder %s176, 2
        %s178 = scalar_select %p177, %s176, 2
        %s179 = smul.u32 128, %s178
        %s180 = smul.u32 2, %s14
        %s181 = ssub.s32 7, %s180
        %p182 = scmp.lt.s32.totalorder %s181, 2
        %s183 = scalar_select %p182, %s181, 2
        %s184 = smul.u32 128, %s183
        %p185 = scmp.lt.s32.totalorder %s180, 6
        %s186 = scalar_select %p185, %s180, 6
        %s187 = smul.addr %s186, 8
        %s188 = scalar_lea.vmem %s1, %s187
        %s189 = smul.u32 2, %s14
        %s190 = ssub.s32 7, %s189
        %p191 = scmp.lt.s32.totalorder %s190, 2
        %s192 = scalar_select %p191, %s190, 2
        %s193 = smul.u32 128, %s192
        %v194 = vld [vmem:[%s174] sm:$0xff]
        %v195 = vld [vmem:[%s174 + $0x8] sm:$0xff]
        %v196 = vld [vmem:[%s188] sm:$0xff]
        %v197 = vld [vmem:[%s188 + $0x8] sm:$0xff]
        %vm198 = vcmask 261120
        %v199 = vsel %vm198, %v194, -inf
        %200 = vmax.xlane.f32.xlu0 %v199
        %v201 = vpop.xlane.xlu0 %200
        %v202 = vsel %vm198, %v195, -inf
        %203 = vmax.xlane.f32.xlu0 %v202
        %v204 = vpop.xlane.xlu0 %203
        %v205 = vsub.f32 %v194, %v201
        %v206 = vsub.f32 %v195, %v204
        %v207 = vmul.f32 %v205, 1.442695
        %v208 = vpow.pop %v207
        %v209 = vmul.f32 %v206, 1.442695
        %v210 = vpow.pop %v209
        %v211 = vsel %vm198, %v208, 0.0
        %212 = vadd.xlane.f32.xlu0 %v211
        %v213 = vpop.xlane.xlu0 %212
        %v214 = vsel %vm198, %v210, 0.0
        %215 = vadd.xlane.f32.xlu0 %v214
        %v216 = vpop.xlane.xlu0 %215
        %v217 = vlog2.pop %v213
        %v218 = vmul.f32 %v217, 0.6931472
        %v219 = vlog2.pop %v216
        %v220 = vmul.f32 %v219, 0.6931472
        %v221 = vadd.f32 %v218, %v201
        %v222 = vadd.f32 %v220, %v204
        %v223 = vlaneseq
        %v224 = vand.u32 %v223, 127
        %225 = vset.pattern.permute.xlu0 0
        %226 = vperm.xlu0 %225, %v196
        %v227 = vpop.permute.xlu0 %226
        %228 = vset.pattern.permute.xlu0 0
        %229 = vperm.xlu0 %228, %v197
        %v230 = vpop.permute.xlu0 %229
        %vm231 = vcmp.eq.s32.totalorder %v224, %v227
        %vm232 = vcmp.eq.s32.totalorder %v224, %v230
        %v233 = vsel %vm231, %v194, 0.0
        %v234 = vsel %vm232, %v195, 0.0
        %v235 = vsel %vm198, %v233, 0.0
        %236 = vadd.xlane.f32.xlu0 %v235
        %v237 = vpop.xlane.xlu0 %236
        %v238 = vsel %vm198, %v234, 0.0
        %239 = vadd.xlane.f32.xlu0 %v238
        %v240 = vpop.xlane.xlu0 %239
        %v241 = vsub.f32 %v221, %v237
        %v242 = vsub.f32 %v222, %v240
        %s243 = smul.u32 %s14, 16
        %v244 = vlaneseq
        %v245 = vshrl.u32 %v244, 7
        %v246 = vadd.s32 %v245, 8
        %v247 = vstv %s243
        %v248 = vadd.s32 %v247, %v245
        %v249 = vadd.s32 %v247, %v246
        %vm250 = vcmp.ne.s32.totalorder %v196, 4294967196
        %vm251 = vcmp.ne.s32.totalorder %v197, 4294967196
        %vm252 = vcmp.lt.s32.totalorder %v248, 50
        %vm253 = vcmp.lt.s32.totalorder %v249, 50
        %vm254 = vmand %vm250, %vm252
        %vm255 = vmand %vm251, %vm253
        %v256 = vmax.f32 %v241, 0.0
        %v257 = vmax.f32 %v242, 0.0
        %v258 = vsel %vm254, %v256, 0.0
        %v259 = vsel %vm255, %v257, 0.0
        %v260 = vsub.f32 0.0, %v258
        %v261 = vsub.f32 0.0, %v259
        %v262 = vmul.f32 %v260, 1.442695
        %v263 = vpow.pop %v262
        %v264 = vmul.f32 %v261, 1.442695
        %v265 = vpow.pop %v264
        %v266 = vsub.f32 1.0, %v263
        %v267 = vsub.f32 1.0, %v265
        %v268 = vmul.f32 %v266, %v266
        %v269 = vmul.f32 %v267, %v267
        %v270 = vmul.f32 %v268, %v258
        %v271 = vmul.f32 %v269, %v259
        %p272 = scmp.eq.s32.totalorder %s14, 0
        // Predicated region
        $region29: #{tpu_custom_call.1} parent=27 // pred_check
          %p273 = pneg %p272
        $region30: #{tpu_custom_call.1} parent=27 // pred_check_branch
          %275 = sbr.rel (%p273) target = $region32
        $region31: #{tpu_custom_call.1} parent=27 // pred_region
          %vm276 = vcmask 0
          %277 = vst.msk [vmem:[#allocation2] sm:$0x1] %vm276, 0.0
        $region32: #{tpu_custom_call.1} parent=27 // pred_fallthru
          _
        %v278 = vld [vmem:[#allocation2] sm:$0x1]
        %vm279 = vcmask 7168
        %v280 = vsel %vm279, %v270, 0.0
        %v281 = vsel %vm279, %v271, 0.0
        %v282 = vadd.f32 %v280, %v281
        %283 = vadd.xlane.f32.xlu0 %v282
        %v284 = vpop.xlane.xlu0 %283
        %v285 = vrot.slane %v284, 4
        %v286 = vadd.f32 %v284, %v285
        %v287 = vrot.slane %v286, 2
        %v288 = vadd.f32 %v286, %v287
        %v289 = vrot.slane %v288, 1
        %v290 = vadd.f32 %v288, %v289
        %s291 = vtos %v290
        %v292 = vstv %s291
        %v293 = vadd.f32 %v278, %v292
        %vm294 = vcmask 0
        %295 = vst.msk [vmem:[#allocation2] sm:$0x1] %vm294, %v293
        %p296 = scmp.eq.s32.totalorder %s14, 3
        // Predicated region
        $region33: #{tpu_custom_call.1} parent=27 // pred_check
          %p297 = pneg %p296
        $region34: #{tpu_custom_call.1} parent=27 // pred_check_branch
          %299 = sbr.rel (%p297) target = $region36
        $region35: #{tpu_custom_call.1} parent=27 // pred_region
          %v300 = vld [vmem:[#allocation2] sm:$0x1]
          %v301 = vmul.f32 %v300, 0.02
          %302 = vst.msk [vmem:[#allocation2] sm:$0x1] %vm294, %v301
        $region36: #{tpu_custom_call.1} parent=27 // pred_fallthru
          _
        // Predicated region
        $region37: #{tpu_custom_call.1} parent=27 // pred_check
          %p303 = pneg %p79
        $region38: #{tpu_custom_call.1} parent=27 // pred_check_branch
          %305 = sbr.rel (%p303) target = $region40
        $region39: #{tpu_custom_call.1} parent=27 // pred_region
          %s307 = ssub.s32 16, 16
          %308 = vsyncadd [#allocation3], %s307
          %s310 = sshll.u32 [#allocation2], 4
          %s311 = int_to_ptr.vmem [resolvable:$true] %s310
          %313 = dma.vmem_to_hbm [thread:$0]  %s311, 16, %s2, [#allocation3]
        $region40: #{tpu_custom_call.1} parent=27 // pred_fallthru
          _
        // Predicated region
        $region41: #{tpu_custom_call.1} parent=27 // pred_check
          %p314 = pneg %p79
        $region42: #{tpu_custom_call.1} parent=27 // pred_check_branch
          %316 = sbr.rel (%p314) target = $region44
        $region43: #{tpu_custom_call.1} parent=27 // pred_region
          %317 = dma.done [#allocation3], 16
        $region44: #{tpu_custom_call.1} parent=27 // pred_fallthru
          _
      $region28: #{tpu_custom_call.1} parent=5 // pred_fallthru
        _
      %p318 = scmp.le.s32.totalorder 2, %s9
      // Predicated region
      $region45: #{tpu_custom_call.1} parent=5 // pred_check
        %p319 = pneg %p318
      $region46: #{tpu_custom_call.1} parent=5 // pred_check_branch
        %321 = sbr.rel (%p319) target = $region48
      $region47: #{tpu_custom_call.1} parent=5 // pred_region
        %s322 = ssub.s32 %s9, 2
      $region48: #{tpu_custom_call.1} parent=5 // pred_fallthru
        _
    $region6: #{tpu_custom_call.1} parent=1 // loop_footer
      %s13 = sadd.s32 1, %s9
    $region7: #{tpu_custom_call.1} parent=1 // loop_footer_branch
      %8 = sbr.rel target = $region3
    $region8: #{tpu_custom_call.1} parent=1 // loop_exit
      _
    %323 = vsyncpa [#allocation3], 1
    %s324 = scalar_lea.sflag [#allocation3], 1
    %325 = vsyncpa %s324, 1

</llo_original>
